<compile_context>
chip_gen: v5e
topology: v5e:2x2
jax: 0.10.0
libtpu: 0.0.40
codegen_flags: <defaults>
</compile_context>

<pallas_src>
import functools

import jax
import jax.numpy as jnp
from jax.experimental import pallas as pl
from jax.experimental.pallas import tpu as pltpu


def _round_up(x, m):
    return ((x + m - 1) // m) * m


def _cdiv(a, b):
    return (a + b - 1) // b


def _vmem_capacity_bytes():
    """Physical per-core VMEM (v5e/v6e: 128 MiB, v7x: 64 MiB); conservative fallback."""
    try:
        cap = int(pltpu.get_tpu_info().vmem_capacity_bytes)
        if cap > 0:
            return cap
    except Exception:
        pass
    return 64 * 1024 * 1024


def _vmem_working_set(tm, ti, H, in_b, w_b):
    """VMEM bytes used by one grid step: double-buffered tiles + scratch + temps."""
    return (
        2 * tm * H * in_b           # x tiles (double-buffered)
        + 2 * H * (2 * ti) * w_b    # fused gate|up slab (double-buffered)
        + 2 * ti * H * w_b          # down-proj slab (double-buffered)
        + 2 * tm * H * in_b         # output tiles (double-buffered)
        + tm * H * 4                # f32 accumulator scratch
        + tm * (2 * ti) * 4         # gu temporary (f32)
        + tm * ti * 4               # h temporary (f32)
        + tm * ti * w_b             # h cast to weight dtype
    )


def _select_tm(H, ti, in_b, w_b, vmem_cap):
    """Largest activation-row tile whose working set fits VMEM (minus headroom)."""
    budget = vmem_cap - (4 << 20)
    for tm in (768, 640, 512, 448, 384, 320, 256, 192, 128, 64, 32, 16, 8):
        if _vmem_working_set(tm, ti, H, in_b, w_b) <= budget:
            return tm
    return 8


def _llama_mlp_kernel(x_ref, wgu_ref, wd_ref, o_ref, acc_ref):
    """One (m_tile, k_tile) grid step.

    x_ref   : [tm, H]      activation rows
    wgu_ref : [H, 2*ti]    fused (gate | up) weight slab for this intermediate tile
    wd_ref  : [ti, H]      down-proj weight slab for this intermediate tile
    o_ref   : [tm, H]      output rows (resident across the k axis)
    acc_ref : [tm, H] f32  accumulator scratch
    """
    k = pl.program_id(1)

    x = x_ref[...]
    # Single MXU matmul producing both gate and up activations for this tile.
    gu = jnp.dot(x, wgu_ref[...], preferred_element_type=jnp.float32)
    ti = wgu_ref.shape[-1] // 2
    g = gu[:, :ti]
    u = gu[:, ti:]
    h = (g * jax.nn.sigmoid(g)) * u  # SiLU(g) * u, in f32
    # Partial down projection for this intermediate tile.
    partial = jnp.dot(h.astype(wd_ref.dtype), wd_ref[...],
                      preferred_element_type=jnp.float32)

    @pl.when(k == 0)
    def _first():
        acc_ref[...] = partial          # direct store: no zero-fill + RMW pass

    @pl.when(k != 0)
    def _accum():
        acc_ref[...] += partial

    @pl.when(k == pl.num_programs(1) - 1)
    def _store():
        o_ref[...] = acc_ref[...].astype(o_ref.dtype)


def prepare_llama_mlp_weights(w_gate, w_up, w_down, *, ti=None):
    """One-time weight preparation.  Call once at load time, NOT per forward pass.

    Args (PyTorch nn.Linear layouts):
      w_gate, w_up : [I, H]
      w_down       : [H, I]
    Returns (per-k contiguous slabs):
      w_gu : [n_k, H, 2*ti]  slab k = (gate cols | up cols) of intermediate tile k
      w_dn : [n_k, ti, H]    down-proj rows of intermediate tile k (zero if padded)
    """
    I, H = w_gate.shape
    if w_up.shape != (I, H) or w_down.shape != (H, I):
        raise ValueError("inconsistent weight shapes")
    w_b = jnp.dtype(w_gate.dtype).itemsize
    if ti is None:
        cap = _vmem_capacity_bytes()
        ti = 512
        # Shrink ti when the double-buffered fused weight slabs alone would eat
        # more than ~half of VMEM (e.g. H>=8192 on a 64 MiB v7x core).
        while ti > 128 and 6 * H * ti * w_b > cap // 2:
            ti //= 2
        ti = max(128, min(ti, _round_up(I, 128)))
    if ti % 128 != 0:
        raise ValueError("ti must be a multiple of 128")

    Ip = _round_up(I, ti)
    pad_i = Ip - I
    if pad_i:
        # Zero padding of the intermediate dim is exact: silu(0) * 0 == 0 and the
        # corresponding down-projection rows are zero.
        w_gate = jnp.pad(w_gate, ((0, pad_i), (0, 0)))
        w_up = jnp.pad(w_up, ((0, pad_i), (0, 0)))
        w_down = jnp.pad(w_down, ((0, 0), (0, pad_i)))
    n_k = Ip // ti
    wg_t = jnp.transpose(w_gate).reshape(H, n_k, ti)
    wu_t = jnp.transpose(w_up).reshape(H, n_k, ti)
    w_gu = jnp.transpose(jnp.concatenate([wg_t, wu_t], axis=2), (1, 0, 2))  # [n_k, H, 2*ti]
    w_dn = jnp.transpose(w_down).reshape(n_k, ti, H)                        # [n_k, ti, H]
    return w_gu, w_dn


@functools.partial(
    jax.jit, static_argnames=("tm_eff", "ti", "n_m", "n_k", "Mp", "vmem_limit"))
def _llama_mlp_pallas(x2d, w_gu, w_dn, *, tm_eff, ti, n_m, n_k, Mp, vmem_limit):
    M, H = x2d.shape
    if Mp != M:
        x2d = jnp.pad(x2d, ((0, Mp - M), (0, 0)))

    out = pl.pallas_call(
        _llama_mlp_kernel,
        out_shape=jax.ShapeDtypeStruct((Mp, H), x2d.dtype),
        grid_spec=pltpu.PrefetchScalarGridSpec(
            num_scalar_prefetch=0,
            grid=(n_m, n_k),
            in_specs=[
                pl.BlockSpec((tm_eff, H), lambda i, k: (i, 0)),        # activations
                pl.BlockSpec((None, H, 2 * ti), lambda i, k: (k, 0, 0)),  # fused gate|up
                pl.BlockSpec((None, ti, H), lambda i, k: (k, 0, 0)),   # down-proj
            ],
            out_specs=pl.BlockSpec((tm_eff, H), lambda i, k: (i, 0)),
            scratch_shapes=[pltpu.VMEM((tm_eff, H), jnp.float32)],
        ),
        compiler_params=pltpu.CompilerParams(
            dimension_semantics=("parallel", "arbitrary"),
            vmem_limit_bytes=vmem_limit,
        ),
    )(x2d, w_gu, w_dn)

    if Mp != M:
        out = out[:M]
    return out


def llama_mlp(x, w_gu, w_dn, *, tm=None):
    """x: [B, S, H]; w_gu / w_dn from prepare_llama_mlp_weights().

    tm=None auto-selects the largest activation-row tile that fits device VMEM
    (the dominant perf lever: weight streaming is amortized over tm rows).
    """
    n_k, H, two_ti = w_gu.shape
    ti = two_ti // 2
    if w_dn.shape != (n_k, ti, H):
        raise ValueError("weights were not produced by prepare_llama_mlp_weights")
    B, S, Hx = x.shape
    if Hx != H:
        raise ValueError("hidden size mismatch between x and prepared weights")

    M = B * S
    in_b = jnp.dtype(x.dtype).itemsize
    w_b = jnp.dtype(w_gu.dtype).itemsize
    vmem_cap = _vmem_capacity_bytes()

    if tm is None:
        tm = _select_tm(H, ti, in_b, w_b, vmem_cap)
    if tm % 8 != 0:
        raise ValueError("tm must be a multiple of 8")

    # Balanced m-tiles: minimize zero padding (e.g. M=300, tm=256 -> 2 tiles of 152
    # instead of one full + one nearly-empty 256 tile).
    n_m = _cdiv(M, tm)
    tm_eff = _round_up(_cdiv(M, n_m), 8)
    Mp = n_m * tm_eff

    # Generation-aware VMEM limit: actual working set (+ margin), clamped to the
    # device's physical capacity rather than a fixed cap.
    work = _vmem_working_set(tm_eff, ti, H, in_b, w_b)
    vmem_limit = int(min(max(work + (8 << 20), 32 << 20),
                         vmem_cap - (2 << 20), 128 << 20))

    out2d = _llama_mlp_pallas(
        x.reshape(M, H), w_gu, w_dn,
        tm_eff=tm_eff, ti=ti, n_m=n_m, n_k=n_k, Mp=Mp, vmem_limit=vmem_limit)
    return out2d.reshape(B, S, H)


def _reference(x, w_gate, w_up, w_down):
    g = jnp.einsum("bsh,ih->bsi", x, w_gate)
    u = jnp.einsum("bsh,ih->bsi", x, w_up)
    h = jax.nn.silu(g) * u
    return jnp.einsum("bsi,hi->bsh", h, w_down)


if __name__ == "__main__":
    # Small, module-consistent shapes (seq=9 deliberately exercises M padding).
    batch, seq = 2, 9
    hidden_size = 256
    intermediate_size = 512

    key = jax.random.PRNGKey(0)
    kx, kg, ku, kd = jax.random.split(key, 4)

    x = jax.random.normal(kx, (batch, seq, hidden_size), dtype=jnp.float32)
    # nn.Linear(in, out, bias=False).weight has shape [out, in]
    w_gate = jax.random.normal(kg, (intermediate_size, hidden_size), jnp.float32) * 0.02
    w_up = jax.random.normal(ku, (intermediate_size, hidden_size), jnp.float32) * 0.02
    w_down = jax.random.normal(kd, (hidden_size, intermediate_size), jnp.float32) * 0.02

    ref = _reference(x, w_gate, w_up, w_down)

    # 1) f32 path with small ti / tm so multi-k accumulation + multi-m tiling are exercised.
    w_gu, w_dn = prepare_llama_mlp_weights(w_gate, w_up, w_down, ti=128)
    out = jax.block_until_ready(llama_mlp(x, w_gu, w_dn, tm=8))
    assert out.shape == (batch, seq, hidden_size)
    assert jnp.allclose(out, ref, atol=2e-4, rtol=2e-4), float(jnp.max(jnp.abs(out - ref)))

    # 2) auto-tiled path (production defaults: auto ti, auto tm, clamped VMEM limit).
    w_gu_a, w_dn_a = prepare_llama_mlp_weights(w_gate, w_up, w_down)
    out_auto = jax.block_until_ready(llama_mlp(x, w_gu_a, w_dn_a))
    assert jnp.allclose(out_auto, ref, atol=2e-4, rtol=2e-4), \
        float(jnp.max(jnp.abs(out_auto - ref)))

    # 3) bf16 production path (bf16 activations/weights, f32 accumulation in-kernel).
    w_gu_bf, w_dn_bf = prepare_llama_mlp_weights(
        w_gate.astype(jnp.bfloat16), w_up.astype(jnp.bfloat16),
        w_down.astype(jnp.bfloat16), ti=128)
    out_bf = jax.block_until_ready(llama_mlp(x.astype(jnp.bfloat16), w_gu_bf, w_dn_bf))
    err = float(jnp.max(jnp.abs(out_bf.astype(jnp.float32) - ref)))
    assert jnp.allclose(out_bf.astype(jnp.float32), ref, atol=2e-2, rtol=5e-2), err

    # TODO(synk): optional fp8 weight storage with per-tile scales for v7x decode-sized M.
    print("KERNEL_OK")
</pallas_src>

<mosaic_0001>
module attributes {stable_mosaic.version = 11 : i64} {
  func.func @_llama_mlp_kernel(%arg0: i32, %arg1: i32, %arg2: memref<8x256xf32, #tpu.memory_space<vmem>>, %arg3: memref<1x256x256xf32, #tpu.memory_space<vmem>>, %arg4: memref<1x128x256xf32, #tpu.memory_space<vmem>>, %arg5: memref<8x256xf32, #tpu.memory_space<vmem>>, %arg6: memref<8x256xf32, #tpu.memory_space<vmem>>) attributes {dimension_semantics = [#tpu.dimension_semantics<parallel>, #tpu.dimension_semantics<arbitrary>], iteration_bounds = array<i64: 3, 4>, scalar_prefetch = 0 : i64, scratch_operands = 1 : i64, tpu.core_type = #tpu.core_type<tc>, window_params = [{transform_indices = @transform_0, window_bounds = array<i64: 8, 256>}, {transform_indices = @transform_1, window_bounds = array<i64: 1, 256, 256>}, {transform_indices = @transform_2, window_bounds = array<i64: 1, 128, 256>}, {transform_indices = @transform_3, window_bounds = array<i64: 8, 256>}]} {
    %c0 = arith.constant 0 : index
    %c0_0 = arith.constant 0 : index
    %0 = vector.load %arg2[%c0, %c0_0] : memref<8x256xf32, #tpu.memory_space<vmem>>, vector<8x256xf32>
    %c0_1 = arith.constant 0 : index
    %c0_2 = arith.constant 0 : index
    %c0_3 = arith.constant 0 : index
    %1 = vector.load %arg3[%c0_1, %c0_2, %c0_3] : memref<1x256x256xf32, #tpu.memory_space<vmem>>, vector<1x256x256xf32>
    %2 = vector.shape_cast %1 : vector<1x256x256xf32> to vector<256x256xf32>
    %cst = arith.constant dense<0.000000e+00> : vector<8x256xf32>
    %3 = tpu.matmul %0, %2, %cst {dimension_numbers = #tpu.dot_dimension_numbers<[1], [0], [0], [1], [0, 0, 1, 1], [], []>} : vector<8x256xf32>, vector<256x256xf32>, vector<8x256xf32> -> vector<8x256xf32>
    %4 = vector.extract_strided_slice %3 {offsets = [0, 0], sizes = [8, 128], strides = [1, 1]} : vector<8x256xf32> to vector<8x128xf32>
    %5 = vector.extract_strided_slice %3 {offsets = [0, 128], sizes = [8, 128], strides = [1, 1]} : vector<8x256xf32> to vector<8x128xf32>
    %6 = arith.negf %4 : vector<8x128xf32>
    %7 = math.exp %6 : vector<8x128xf32>
    %cst_4 = arith.constant 1.000000e+00 : f32
    %8 = vector.broadcast %cst_4 : f32 to vector<8x128xf32>
    %9 = arith.addf %8, %7 : vector<8x128xf32>
    %10 = arith.divf %8, %9 : vector<8x128xf32>
    %11 = arith.mulf %4, %10 : vector<8x128xf32>
    %12 = arith.mulf %11, %5 : vector<8x128xf32>
    %c0_5 = arith.constant 0 : index
    %c0_6 = arith.constant 0 : index
    %c0_7 = arith.constant 0 : index
    %13 = vector.load %arg4[%c0_5, %c0_6, %c0_7] : memref<1x128x256xf32, #tpu.memory_space<vmem>>, vector<1x128x256xf32>
    %14 = vector.shape_cast %13 : vector<1x128x256xf32> to vector<128x256xf32>
    %cst_8 = arith.constant dense<0.000000e+00> : vector<8x256xf32>
    %15 = tpu.matmul %12, %14, %cst_8 {dimension_numbers = #tpu.dot_dimension_numbers<[1], [0], [0], [1], [0, 0, 1, 1], [], []>} : vector<8x128xf32>, vector<128x256xf32>, vector<8x256xf32> -> vector<8x256xf32>
    %c0_i32 = arith.constant 0 : i32
    %16 = arith.cmpi eq, %arg1, %c0_i32 : i32
    %17 = arith.extui %16 : i1 to i32
    %c0_i32_9 = arith.constant 0 : i32
    %18 = arith.cmpi ne, %17, %c0_i32_9 : i32
    scf.if %18 {
      %c0_13 = arith.constant 0 : index
      %c0_14 = arith.constant 0 : index
      %25 = vector.load %arg6[%c0_13, %c0_14] : memref<8x256xf32, #tpu.memory_space<vmem>>, vector<8x256xf32>
      tpu.vector_store %arg6[%c0_13, %c0_14], %15 {strides = array<i32>} : memref<8x256xf32, #tpu.memory_space<vmem>>, vector<8x256xf32>,
    } else {
    }
    %c0_i32_10 = arith.constant 0 : i32
    %19 = arith.cmpi ne, %arg1, %c0_i32_10 : i32
    %20 = arith.extui %19 : i1 to i32
    %c0_i32_11 = arith.constant 0 : i32
    %21 = arith.cmpi ne, %20, %c0_i32_11 : i32
    scf.if %21 {
      %c0_13 = arith.constant 0 : index
      %c0_14 = arith.constant 0 : index
      %25 = vector.load %arg6[%c0_13, %c0_14] : memref<8x256xf32, #tpu.memory_space<vmem>>, vector<8x256xf32>
      %26 = arith.addf %25, %15 : vector<8x256xf32>
      %c0_15 = arith.constant 0 : index
      %c0_16 = arith.constant 0 : index
      %27 = vector.load %arg6[%c0_15, %c0_16] : memref<8x256xf32, #tpu.memory_space<vmem>>, vector<8x256xf32>
      tpu.vector_store %arg6[%c0_15, %c0_16], %26 {strides = array<i32>} : memref<8x256xf32, #tpu.memory_space<vmem>>, vector<8x256xf32>,
    } else {
    }
    %c3_i32 = arith.constant 3 : i32
    %22 = arith.cmpi eq, %arg1, %c3_i32 : i32
    %23 = arith.extui %22 : i1 to i32
    %c0_i32_12 = arith.constant 0 : i32
    %24 = arith.cmpi ne, %23, %c0_i32_12 : i32
    scf.if %24 {
      %c0_13 = arith.constant 0 : index
      %c0_14 = arith.constant 0 : index
      %25 = vector.load %arg6[%c0_13, %c0_14] : memref<8x256xf32, #tpu.memory_space<vmem>>, vector<8x256xf32>
      %c0_15 = arith.constant 0 : index
      %c0_16 = arith.constant 0 : index
      %26 = vector.load %arg5[%c0_15, %c0_16] : memref<8x256xf32, #tpu.memory_space<vmem>>, vector<8x256xf32>
      tpu.vector_store %arg5[%c0_15, %c0_16], %25 {strides = array<i32>} : memref<8x256xf32, #tpu.memory_space<vmem>>, vector<8x256xf32>,
    } else {
    }
    return
  }
  func.func @transform_0(%arg0: i32, %arg1: i32) -> (i32, i32) {
    %c0_i32 = arith.constant 0 : i32
    %c0_i32_0 = arith.constant 0 : i32
    return %arg0, %c0_i32 : i32, i32
  }
  func.func @transform_1(%arg0: i32, %arg1: i32) -> (i32, i32, i32) {
    %c0_i32 = arith.constant 0 : i32
    %c0_i32_0 = arith.constant 0 : i32
    %c0_i32_1 = arith.constant 0 : i32
    return %arg1, %c0_i32, %c0_i32_0 : i32, i32, i32
  }
  func.func @transform_2(%arg0: i32, %arg1: i32) -> (i32, i32, i32) {
    %c0_i32 = arith.constant 0 : i32
    %c0_i32_0 = arith.constant 0 : i32
    %c0_i32_1 = arith.constant 0 : i32
    return %arg1, %c0_i32, %c0_i32_0 : i32, i32, i32
  }
  func.func @transform_3(%arg0: i32, %arg1: i32) -> (i32, i32) {
    %c0_i32 = arith.constant 0 : i32
    %c0_i32_0 = arith.constant 0 : i32
    return %arg0, %c0_i32 : i32, i32
  }
}

</mosaic_0001>

<llo_original>
// kernel: _llama_mlp_pallas.1
$region0: #{_llama_mlp_pallas.1}
  #allocation0 [shape = 'u32[]', space=smem, size = 0x4, offset = 0x4, fixed_abs, tag = 'smem constant byte address 0x4 - core index']
  #allocation1 [shape = 'u32[72,128]{1,0:T(1,128)}', space=vmem, size = 0x9000, scoped, tag = 'internal scratch']
  #allocation2 [shape = 'f32[8,256]{1,0:T(8,128)}', space=vmem, size = 0x2000, scoped, tag = 'scratch operand']
  %s0 = inlined_call_operand.vmem [shape: f32[24,256], index: 0, kind: input, shape index: {}]
  %s1 = inlined_call_operand.hbm [shape: f32[4,256,256], index: 1, kind: input, shape index: {}]
  %s2 = inlined_call_operand.hbm [shape: f32[4,128,256], index: 2, kind: input, shape index: {}]
  %s3 = inlined_call_operand.hbm [shape: f32[24,256], index: 3, kind: output, shape index: {}]
  %s4 = sld [smem:[#allocation0]]
  $region65: #{_llama_mlp_pallas.1} parent=0
    _
  %s6 = ssub.s32 1, %s4
  %s7 = scalar_select 0, %s6, %s4
  $region1: #{_llama_mlp_pallas.1} parent=0
    #allocation3 [shape = 'u8[524288]{0}', space=vmem, size = 0x80000, scoped, tag = 'input window, operand 1']
    #allocation4 [shape = 's32[2]{0}', space=sflag, size = 0x8, scoped, tag = 'scoped memory for _llama_mlp_pallas.1']
    #allocation5 [shape = 's32[2]{0}', space=sflag, size = 0x8, scoped, tag = 'scoped memory for _llama_mlp_pallas.1']
    #allocation6 [shape = 'u8[262144]{0}', space=vmem, size = 0x40000, scoped, tag = 'input window, operand 2']
    #allocation7 [shape = 's32[2]{0}', space=sflag, size = 0x8, scoped, tag = 'scoped memory for _llama_mlp_pallas.1']
    #allocation8 [shape = 'u8[16384]{0}', space=vmem, size = 0x4000, scoped, tag = 'output window, operand 0']
    %8 = vsyncpa [#allocation4], 0
    %s9 = scalar_lea.sflag [#allocation4], 1
    %10 = vsyncpa %s9, 0
    %11 = vsyncpa [#allocation7], 0
    %s12 = scalar_lea.sflag [#allocation7], 1
    %13 = vsyncpa %s12, 0
    %14 = vsyncpa [#allocation5], 0
    %s15 = scalar_lea.sflag [#allocation5], 1
    %16 = vsyncpa %s15, 0
    loop: start=0, step=1, limit=14
    $region2: #{_llama_mlp_pallas.1} parent=1 // loop_pre_header
      _
    $region3: #{_llama_mlp_pallas.1} parent=1 // loop_header
      %s18 = sphi 0, %s22
      %p19 = scmp.ge.s32.totalorder %s18, 14
      %s25 = sphi 0, %s37
      %s26 = sphi 0, %s33
      %s27 = sphi 0, %s25
      %s28 = sphi 0, %s26
      %s29 = sphi 0, %s27
      %s30 = sphi 0, %s28
      %s40 = sphi 0, %s42
      %s43 = sphi 0, %s40
      %s44 = sphi 0, %s43
      %s60 = sphi 0, %s44
      %s66 = sphi 0, %s68
      %s69 = sphi 0, %s66
      %s70 = sphi 0, %s69
      %s86 = sphi 0, %s70
      %s92 = sphi 0, %s94
      %s95 = sphi 0, %s92
      %s96 = sphi 0, %s95
      %s112 = sphi 0, %s96
      %s118 = sphi 0, %s120
      %s121 = sphi 0, %s118
      %s122 = sphi 0, %s121
      %s138 = sphi 0, %s122
    $region4: #{_llama_mlp_pallas.1} parent=1 // loop_header_branch
      %21 = sbr.rel (%p19) target = $region8
    $region5: #{_llama_mlp_pallas.1} parent=1 // loop_body
      %s23 = ssub.s32 %s18, 1
      %s24 = ssub.s32 %s18, 2
      %s31 = sadd.s32 1, %s26
      %p32 = scmp.ge.s32.totalorder %s31, 4
      %s33 = scalar_select %p32, 0, %s31
      %s34 = sadd.s32 1, %s25
      %s35 = scalar_select %p32, %s34, %s25
      %p36 = scmp.ge.s32.totalorder %s35, 3
      %s37 = scalar_select %p36, 0, %s35
      %s38 = ssub.s32 %s25, %s37
      %p39 = scmp.eq.s32.totalorder %s38, 0
      %s41 = sadd.s32 %s40, 1
      %s42 = scalar_select %p39, %s40, %s41
      %p45 = pneg %p39
      %p46 = scmp.eq.s32.totalorder %s18, 11
      %p47 = por %p45, %p46
      %p48 = scmp.ne.s32.totalorder %s40, %s43
      %p49 = scmp.eq.s32.totalorder %s18, 0
      %p50 = por %p48, %p49
      %p51 = scmp.ne.s32.totalorder %s40, %s43
      %p52 = scmp.eq.s32.totalorder %s23, 11
      %p53 = por %p51, %p52
      %p54 = scmp.ne.s32.totalorder %s43, %s44
      %p55 = scmp.eq.s32.totalorder %s23, 0
      %p56 = por %p54, %p55
      %p57 = scmp.ne.s32.totalorder %s43, %s44
      %p58 = scmp.eq.s32.totalorder %s24, 11
      %p59 = por %p57, %p58
      %p61 = scmp.ne.s32.totalorder %s44, %s60
      %p62 = scmp.eq.s32.totalorder %s24, 0
      %p63 = por %p61, %p62
      %s64 = ssub.s32 %s26, %s33
      %p65 = scmp.eq.s32.totalorder %s64, 0
      %s67 = sadd.s32 %s66, 1
      %s68 = scalar_select %p65, %s66, %s67
      %p71 = pneg %p65
      %p72 = scmp.eq.s32.totalorder %s18, 11
      %p73 = por %p71, %p72
      %p74 = scmp.ne.s32.totalorder %s66, %s69
      %p75 = scmp.eq.s32.totalorder %s18, 0
      %p76 = por %p74, %p75
      %p77 = scmp.ne.s32.totalorder %s66, %s69
      %p78 = scmp.eq.s32.totalorder %s23, 11
      %p79 = por %p77, %p78
      %p80 = scmp.ne.s32.totalorder %s69, %s70
      %p81 = scmp.eq.s32.totalorder %s23, 0
      %p82 = por %p80, %p81
      %p83 = scmp.ne.s32.totalorder %s69, %s70
      %p84 = scmp.eq.s32.totalorder %s24, 11
      %p85 = por %p83, %p84
      %p87 = scmp.ne.s32.totalorder %s70, %s86
      %p88 = scmp.eq.s32.totalorder %s24, 0
      %p89 = por %p87, %p88
      %s90 = ssub.s32 %s26, %s33
      %p91 = scmp.eq.s32.totalorder %s90, 0
      %s93 = sadd.s32 %s92, 1
      %s94 = scalar_select %p91, %s92, %s93
      %p97 = pneg %p91
      %p98 = scmp.eq.s32.totalorder %s18, 11
      %p99 = por %p97, %p98
      %p100 = scmp.ne.s32.totalorder %s92, %s95
      %p101 = scmp.eq.s32.totalorder %s18, 0
      %p102 = por %p100, %p101
      %p103 = scmp.ne.s32.totalorder %s92, %s95
      %p104 = scmp.eq.s32.totalorder %s23, 11
      %p105 = por %p103, %p104
      %p106 = scmp.ne.s32.totalorder %s95, %s96
      %p107 = scmp.eq.s32.totalorder %s23, 0
      %p108 = por %p106, %p107
      %p109 = scmp.ne.s32.totalorder %s95, %s96
      %p110 = scmp.eq.s32.totalorder %s24, 11
      %p111 = por %p109, %p110
      %p113 = scmp.ne.s32.totalorder %s96, %s112
      %p114 = scmp.eq.s32.totalorder %s24, 0
      %p115 = por %p113, %p114
      %s116 = ssub.s32 %s25, %s37
      %p117 = scmp.eq.s32.totalorder %s116, 0
      %s119 = sadd.s32 %s118, 1
      %s120 = scalar_select %p117, %s118, %s119
      %p123 = pneg %p117
      %p124 = scmp.eq.s32.totalorder %s18, 11
      %p125 = por %p123, %p124
      %p126 = scmp.ne.s32.totalorder %s118, %s121
      %p127 = scmp.eq.s32.totalorder %s18, 0
      %p128 = por %p126, %p127
      %p129 = scmp.ne.s32.totalorder %s118, %s121
      %p130 = scmp.eq.s32.totalorder %s23, 11
      %p131 = por %p129, %p130
      %p132 = scmp.ne.s32.totalorder %s121, %s122
      %p133 = scmp.eq.s32.totalorder %s23, 0
      %p134 = por %p132, %p133
      %p135 = scmp.ne.s32.totalorder %s121, %s122
      %p136 = scmp.eq.s32.totalorder %s24, 11
      %p137 = por %p135, %p136
      %p139 = scmp.ne.s32.totalorder %s122, %s138
      %p140 = scmp.eq.s32.totalorder %s24, 0
      %p141 = por %p139, %p140
      %p142 = scmp.le.s32.totalorder 1, %s18
      %p143 = scmp.lt.s32.totalorder %s18, 13
      %p144 = pnand %p142, %p143
      %p145 = pneg %p144
      // Predicated region
      $region9: #{_llama_mlp_pallas.1} parent=5 // pred_check
        _
      $region10: #{_llama_mlp_pallas.1} parent=5 // pred_check_branch
        %147 = sbr.rel (%p144) target = $region12
      $region11: #{_llama_mlp_pallas.1} parent=5 // pred_region
        %s148 = ssub.s32 %s18, 1
      $region12: #{_llama_mlp_pallas.1} parent=5 // pred_fallthru
        _
      %p149 = scmp.lt.s32.totalorder %s18, 12
      // Predicated region
      $region13: #{_llama_mlp_pallas.1} parent=5 // pred_check
        %p150 = pneg %p149
      $region14: #{_llama_mlp_pallas.1} parent=5 // pred_check_branch
        %152 = sbr.rel (%p150) target = $region16
      $region15: #{_llama_mlp_pallas.1} parent=5 // pred_region
        // Predicated region
        $region17: #{_llama_mlp_pallas.1} parent=15 // pred_check
          %p153 = pneg %p50
        $region18: #{_llama_mlp_pallas.1} parent=15 // pred_check_branch
          %155 = sbr.rel (%p153) target = $region20
        $region19: #{_llama_mlp_pallas.1} parent=15 // pred_region
          %p156 = scmp.lt.s32.totalorder %s25, 2
          %s157 = scalar_select %p156, %s25, 2
          %s158 = smul.addr %s157, 2
          %s159 = smul.addr %s158, 8
          %s160 = scalar_lea.vmem %s0, %s159
        $region20: #{_llama_mlp_pallas.1} parent=15 // pred_fallthru
          _
        // Predicated region
        $region21: #{_llama_mlp_pallas.1} parent=15 // pred_check
          %p161 = pneg %p76
        $region22: #{_llama_mlp_pallas.1} parent=15 // pred_check_branch
          %163 = sbr.rel (%p161) target = $region24
        $region23: #{_llama_mlp_pallas.1} parent=15 // pred_region
          %s164 = sand.u32 %s66, 1
          %s165 = scalar_lea.sflag [#allocation4], %s164
          %s166 = sand.u32 %s66, 1
          %s167 = smul.addr %s166, 512
          %s168 = scalar_lea.vmem [#allocation3], %s167
          %170 = vsyncadd %s165, 0
          %s171 = smul.addr %s26, 64
          %s172 = smul.addr %s171, 8
          %s173 = scalar_lea.hbm %s1, %s172
          %s174 = sshll.u32 %s173, 4
          %s175 = int_to_ptr.hbm [resolvable:$true] %s174
          %s176 = sshll.u32 %s168, 4
          %s177 = int_to_ptr.vmem [resolvable:$true] %s176
          %182 = dma.hbm_to_vmem [thread:$0]  %s175, 8192, %s177, %s165, 256, 256, 16
        $region24: #{_llama_mlp_pallas.1} parent=15 // pred_fallthru
          _
        // Predicated region
        $region25: #{_llama_mlp_pallas.1} parent=15 // pred_check
          %p183 = pneg %p102
        $region26: #{_llama_mlp_pallas.1} parent=15 // pred_check_branch
          %185 = sbr.rel (%p183) target = $region28
        $region27: #{_llama_mlp_pallas.1} parent=15 // pred_region
          %s186 = sand.u32 %s92, 1
          %s187 = scalar_lea.sflag [#allocation7], %s186
          %s188 = sand.u32 %s92, 1
          %s189 = smul.addr %s188, 256
          %s190 = scalar_lea.vmem [#allocation6], %s189
          %192 = vsyncadd %s187, 0
          %s193 = smul.addr %s26, 32
          %s194 = smul.addr %s193, 8
          %s195 = scalar_lea.hbm %s2, %s194
          %s196 = sshll.u32 %s195, 4
          %s197 = int_to_ptr.hbm [resolvable:$true] %s196
          %s198 = sshll.u32 %s190, 4
          %s199 = int_to_ptr.vmem [resolvable:$true] %s198
          %204 = dma.hbm_to_vmem [thread:$0]  %s197, 4096, %s199, %s187, 256, 256, 16
        $region28: #{_llama_mlp_pallas.1} parent=15 // pred_fallthru
          _
      $region16: #{_llama_mlp_pallas.1} parent=5 // pred_fallthru
        _
      %p205 = scmp.le.s32.totalorder 1, %s18
      %p206 = scmp.lt.s32.totalorder %s18, 13
      %p207 = pnand %p205, %p206
      %p208 = pneg %p207
      // Predicated region
      $region29: #{_llama_mlp_pallas.1} parent=5 // pred_check
        _
      $region30: #{_llama_mlp_pallas.1} parent=5 // pred_check_branch
        %210 = sbr.rel (%p207) target = $region32
      $region31: #{_llama_mlp_pallas.1} parent=5 // pred_region
        %s211 = ssub.s32 %s18, 1
        %s212 = sand.u32 %s69, 1
        %s213 = scalar_lea.sflag [#allocation4], %s212
        %s214 = sand.u32 %s69, 1
        %s215 = smul.addr %s214, 512
        %s216 = scalar_lea.vmem [#allocation3], %s215
        // Predicated region
        $region33: #{_llama_mlp_pallas.1} parent=31 // pred_check
          %p217 = pneg %p82
        $region34: #{_llama_mlp_pallas.1} parent=31 // pred_check_branch
          %219 = sbr.rel (%p217) target = $region36
        $region35: #{_llama_mlp_pallas.1} parent=31 // pred_region
          %221 = dma.done %s213, 8192
        $region36: #{_llama_mlp_pallas.1} parent=31 // pred_fallthru
          _
        %s222 = sand.u32 %s95, 1
        %s223 = scalar_lea.sflag [#allocation7], %s222
        %s224 = sand.u32 %s95, 1
        %s225 = smul.addr %s224, 256
        %s226 = scalar_lea.vmem [#allocation6], %s225
        // Predicated region
        $region37: #{_llama_mlp_pallas.1} parent=31 // pred_check
          %p227 = pneg %p108
        $region38: #{_llama_mlp_pallas.1} parent=31 // pred_check_branch
          %229 = sbr.rel (%p227) target = $region40
        $region39: #{_llama_mlp_pallas.1} parent=31 // pred_region
          %231 = dma.done %s223, 4096
        $region40: #{_llama_mlp_pallas.1} parent=31 // pred_fallthru
          _
        %p232 = scmp.lt.s32.totalorder %s27, 2
        %s233 = scalar_select %p232, %s27, 2
        %s234 = smul.addr %s233, 2
        %s235 = smul.addr %s234, 8
        %s236 = scalar_lea.vmem %s0, %s235
        %p237 = pneg %p56
        %p238 = pneg %p53
        %s239 = sand.u32 %s69, 1
        %s240 = scalar_lea.sflag [#allocation4], %s239
        %s241 = sand.u32 %s69, 1
        %s242 = smul.addr %s241, 512
        %s243 = scalar_lea.vmem [#allocation3], %s242
        %p244 = pneg %p82
        %p245 = pneg %p79
        %s246 = sand.u32 %s95, 1
        %s247 = scalar_lea.sflag [#allocation7], %s246
        %s248 = sand.u32 %s95, 1
        %s249 = smul.addr %s248, 256
        %s250 = scalar_lea.vmem [#allocation6], %s249
        %p251 = pneg %p108
        %p252 = pneg %p105
        %p253 = pneg %p134
        %p254 = pneg %p131
        %s255 = sand.u32 %s121, 1
        %s256 = scalar_lea.sflag [#allocation5], %s255
        %s257 = sand.u32 %s121, 1
        %s258 = smul.addr %s257, 16
        %s259 = scalar_lea.vmem [#allocation8], %s258
        %p260 = scmp.lt.s32.totalorder %s27, 2
        %s261 = scalar_select %p260, %s27, 2
        %s262 = smul.addr %s261, 2
        %s263 = smul.addr %s262, 8
        %s264 = scalar_lea.vmem %s0, %s263
        %v265 = vld [vmem:[%s264] sm:$0xff]
        %v266 = vld [vmem:[%s264 + $0x8] sm:$0xff]
        %v267 = vld [vmem:[%s216] sm:$0xff]
        %v268 = vld [vmem:[%s216 + $0x8] sm:$0xff]
        %v269 = vld [vmem:[%s216 + $0x10] sm:$0xff]
        %v270 = vld [vmem:[%s216 + $0x18] sm:$0xff]
        %v271 = vld [vmem:[%s216 + $0x20] sm:$0xff]
        %v272 = vld [vmem:[%s216 + $0x28] sm:$0xff]
        %v273 = vld [vmem:[%s216 + $0x30] sm:$0xff]
        %v274 = vld [vmem:[%s216 + $0x38] sm:$0xff]
        %v275 = vld [vmem:[%s216 + $0x40] sm:$0xff]
        %v276 = vld [vmem:[%s216 + $0x48] sm:$0xff]
        %v277 = vld [vmem:[%s216 + $0x50] sm:$0xff]
        %v278 = vld [vmem:[%s216 + $0x58] sm:$0xff]
        %v279 = vld [vmem:[%s216 + $0x60] sm:$0xff]
        %v280 = vld [vmem:[%s216 + $0x68] sm:$0xff]
        %v281 = vld [vmem:[%s216 + $0x70] sm:$0xff]
        %v282 = vld [vmem:[%s216 + $0x78] sm:$0xff]
        %v283 = vld [vmem:[%s216 + $0x80] sm:$0xff]
        %v284 = vld [vmem:[%s216 + $0x88] sm:$0xff]
        %v285 = vld [vmem:[%s216 + $0x90] sm:$0xff]
        %v286 = vld [vmem:[%s216 + $0x98] sm:$0xff]
        %v287 = vld [vmem:[%s216 + $0xa0] sm:$0xff]
        %v288 = vld [vmem:[%s216 + $0xa8] sm:$0xff]
        %v289 = vld [vmem:[%s216 + $0xb0] sm:$0xff]
        %v290 = vld [vmem:[%s216 + $0xb8] sm:$0xff]
        %v291 = vld [vmem:[%s216 + $0xc0] sm:$0xff]
        %v292 = vld [vmem:[%s216 + $0xc8] sm:$0xff]
        %v293 = vld [vmem:[%s216 + $0xd0] sm:$0xff]
        %v294 = vld [vmem:[%s216 + $0xd8] sm:$0xff]
        %v295 = vld [vmem:[%s216 + $0xe0] sm:$0xff]
        %v296 = vld [vmem:[%s216 + $0xe8] sm:$0xff]
        %v297 = vld [vmem:[%s216 + $0xf0] sm:$0xff]
        %v298 = vld [vmem:[%s216 + $0xf8] sm:$0xff]
        %v299 = vld [vmem:[%s216 + $0x100] sm:$0xff]
        %v300 = vld [vmem:[%s216 + $0x108] sm:$0xff]
        %v301 = vld [vmem:[%s216 + $0x110] sm:$0xff]
        %v302 = vld [vmem:[%s216 + $0x118] sm:$0xff]
        %v303 = vld [vmem:[%s216 + $0x120] sm:$0xff]
        %v304 = vld [vmem:[%s216 + $0x128] sm:$0xff]
        %v305 = vld [vmem:[%s216 + $0x130] sm:$0xff]
        %v306 = vld [vmem:[%s216 + $0x138] sm:$0xff]
        %v307 = vld [vmem:[%s216 + $0x140] sm:$0xff]
        %v308 = vld [vmem:[%s216 + $0x148] sm:$0xff]
        %v309 = vld [vmem:[%s216 + $0x150] sm:$0xff]
        %v310 = vld [vmem:[%s216 + $0x158] sm:$0xff]
        %v311 = vld [vmem:[%s216 + $0x160] sm:$0xff]
        %v312 = vld [vmem:[%s216 + $0x168] sm:$0xff]
        %v313 = vld [vmem:[%s216 + $0x170] sm:$0xff]
        %v314 = vld [vmem:[%s216 + $0x178] sm:$0xff]
        %v315 = vld [vmem:[%s216 + $0x180] sm:$0xff]
        %v316 = vld [vmem:[%s216 + $0x188] sm:$0xff]
        %v317 = vld [vmem:[%s216 + $0x190] sm:$0xff]
        %v318 = vld [vmem:[%s216 + $0x198] sm:$0xff]
        %v319 = vld [vmem:[%s216 + $0x1a0] sm:$0xff]
        %v320 = vld [vmem:[%s216 + $0x1a8] sm:$0xff]
        %v321 = vld [vmem:[%s216 + $0x1b0] sm:$0xff]
        %v322 = vld [vmem:[%s216 + $0x1b8] sm:$0xff]
        %v323 = vld [vmem:[%s216 + $0x1c0] sm:$0xff]
        %v324 = vld [vmem:[%s216 + $0x1c8] sm:$0xff]
        %v325 = vld [vmem:[%s216 + $0x1d0] sm:$0xff]
        %v326 = vld [vmem:[%s216 + $0x1d8] sm:$0xff]
        %v327 = vld [vmem:[%s216 + $0x1e0] sm:$0xff]
        %v328 = vld [vmem:[%s216 + $0x1e8] sm:$0xff]
        %v329 = vld [vmem:[%s216 + $0x1f0] sm:$0xff]
        %v330 = vld [vmem:[%s216 + $0x1f8] sm:$0xff]
        %331 = vmatpush.msra.mxu0 %v297
        %332 = vmatpush.msra.mxu0 %v295
        %333 = vmatpush.msra.mxu0 %v293
        %334 = vmatpush.msra.mxu0 %v291
        %335 = vmatpush.msra.mxu0 %v289
        %336 = vmatpush.msra.mxu0 %v287
        %337 = vmatpush.msra.mxu0 %v285
        %338 = vmatpush.msra.mxu0 %v283
        %339 = vmatpush.msra.mxu0 %v281
        %340 = vmatpush.msra.mxu0 %v279
        %341 = vmatpush.msra.mxu0 %v277
        %342 = vmatpush.msra.mxu0 %v275
        %343 = vmatpush.msra.mxu0 %v273
        %344 = vmatpush.msra.mxu0 %v271
        %345 = vmatpush.msra.mxu0 %v269
        %346 = vmatpush.msra.mxu0 %v267
        %347 = vmatmul.f32.gmra.mxu0 %v265
        %v348 = vpop.f32.mrf.mxu0
        %v349 = vadd.f32 0.0, %v348
        %350 = vdwg.mxu0
        %351 = vmatpush.msra.mxu0 %v329
        %352 = vmatpush.msra.mxu0 %v327
        %353 = vmatpush.msra.mxu0 %v325
        %354 = vmatpush.msra.mxu0 %v323
        %355 = vmatpush.msra.mxu0 %v321
        %356 = vmatpush.msra.mxu0 %v319
        %357 = vmatpush.msra.mxu0 %v317
        %358 = vmatpush.msra.mxu0 %v315
        %359 = vmatpush.msra.mxu0 %v313
        %360 = vmatpush.msra.mxu0 %v311
        %361 = vmatpush.msra.mxu0 %v309
        %362 = vmatpush.msra.mxu0 %v307
        %363 = vmatpush.msra.mxu0 %v305
        %364 = vmatpush.msra.mxu0 %v303
        %365 = vmatpush.msra.mxu0 %v301
        %366 = vmatpush.msra.mxu0 %v299
        %367 = vmatmul.f32.gmra.mxu0 %v266
        %v368 = vpop.f32.mrf.mxu0
        %v369 = vadd.f32 %v349, %v368
        %370 = vdwg.mxu0
        %371 = vmatpush.msra.mxu0 %v298
        %372 = vmatpush.msra.mxu0 %v296
        %373 = vmatpush.msra.mxu0 %v294
        %374 = vmatpush.msra.mxu0 %v292
        %375 = vmatpush.msra.mxu0 %v290
        %376 = vmatpush.msra.mxu0 %v288
        %377 = vmatpush.msra.mxu0 %v286
        %378 = vmatpush.msra.mxu0 %v284
        %379 = vmatpush.msra.mxu0 %v282
        %380 = vmatpush.msra.mxu0 %v280
        %381 = vmatpush.msra.mxu0 %v278
        %382 = vmatpush.msra.mxu0 %v276
        %383 = vmatpush.msra.mxu0 %v274
        %384 = vmatpush.msra.mxu0 %v272
        %385 = vmatpush.msra.mxu0 %v270
        %386 = vmatpush.msra.mxu0 %v268
        %387 = vmatmul.f32.gmra.mxu0 %v265
        %v388 = vpop.f32.mrf.mxu0
        %v389 = vadd.f32 0.0, %v388
        %390 = vdwg.mxu0
        %391 = vmatpush.msra.mxu0 %v330
        %392 = vmatpush.msra.mxu0 %v328
        %393 = vmatpush.msra.mxu0 %v326
        %394 = vmatpush.msra.mxu0 %v324
        %395 = vmatpush.msra.mxu0 %v322
        %396 = vmatpush.msra.mxu0 %v320
        %397 = vmatpush.msra.mxu0 %v318
        %398 = vmatpush.msra.mxu0 %v316
        %399 = vmatpush.msra.mxu0 %v314
        %400 = vmatpush.msra.mxu0 %v312
        %401 = vmatpush.msra.mxu0 %v310
        %402 = vmatpush.msra.mxu0 %v308
        %403 = vmatpush.msra.mxu0 %v306
        %404 = vmatpush.msra.mxu0 %v304
        %405 = vmatpush.msra.mxu0 %v302
        %406 = vmatpush.msra.mxu0 %v300
        %407 = vmatmul.f32.gmra.mxu0 %v266
        %v408 = vpop.f32.mrf.mxu0
        %v409 = vadd.f32 %v389, %v408
        %410 = vdwg.mxu0
        %v411 = vxor.u32 %v369, 2147483648
        %v412 = vmul.f32 %v411, 1.442695
        %v413 = vpow.pop %v412
        %v414 = vadd.f32 %v413, 1.0
        %v415 = vrcp.pop %v414
        %v416 = vmul.f32 %v414, %v415
        %v417 = vsub.f32 1.0, %v416
        %v418 = vmul.f32 %v415, %v417
        %v419 = vadd.f32 %v415, %v418
        %vm420 = vweird.f32 %v414
        %vm421 = vweird.f32 %v415
        %vm422 = vmor %vm420, %vm421
        %v423 = vsel %vm422, %v415, %v419
        %v424 = vand.u32 2147483647, %v414
        %vm425 = vcmp.eq.f32.partialorder %v424, 8.507059e+37
        %v426 = vand.u32 %v414, 2147483648
        %v427 = vor.u32 1.1754944e-38, %v426
        %v428 = vsel %vm425, %v427, %v423
        %v429 = vmul.f32 1.0, %v428
        %v430 = vmul.f32 %v369, %v429
        %v431 = vmul.f32 %v430, %v409
        %v432 = vld [vmem:[%s226] sm:$0xff]
        %v433 = vld [vmem:[%s226 + $0x8] sm:$0xff]
        %v434 = vld [vmem:[%s226 + $0x10] sm:$0xff]
        %v435 = vld [vmem:[%s226 + $0x18] sm:$0xff]
        %v436 = vld [vmem:[%s226 + $0x20] sm:$0xff]
        %v437 = vld [vmem:[%s226 + $0x28] sm:$0xff]
        %v438 = vld [vmem:[%s226 + $0x30] sm:$0xff]
        %v439 = vld [vmem:[%s226 + $0x38] sm:$0xff]
        %v440 = vld [vmem:[%s226 + $0x40] sm:$0xff]
        %v441 = vld [vmem:[%s226 + $0x48] sm:$0xff]
        %v442 = vld [vmem:[%s226 + $0x50] sm:$0xff]
        %v443 = vld [vmem:[%s226 + $0x58] sm:$0xff]
        %v444 = vld [vmem:[%s226 + $0x60] sm:$0xff]
        %v445 = vld [vmem:[%s226 + $0x68] sm:$0xff]
        %v446 = vld [vmem:[%s226 + $0x70] sm:$0xff]
        %v447 = vld [vmem:[%s226 + $0x78] sm:$0xff]
        %v448 = vld [vmem:[%s226 + $0x80] sm:$0xff]
        %v449 = vld [vmem:[%s226 + $0x88] sm:$0xff]
        %v450 = vld [vmem:[%s226 + $0x90] sm:$0xff]
        %v451 = vld [vmem:[%s226 + $0x98] sm:$0xff]
        %v452 = vld [vmem:[%s226 + $0xa0] sm:$0xff]
        %v453 = vld [vmem:[%s226 + $0xa8] sm:$0xff]
        %v454 = vld [vmem:[%s226 + $0xb0] sm:$0xff]
        %v455 = vld [vmem:[%s226 + $0xb8] sm:$0xff]
        %v456 = vld [vmem:[%s226 + $0xc0] sm:$0xff]
        %v457 = vld [vmem:[%s226 + $0xc8] sm:$0xff]
        %v458 = vld [vmem:[%s226 + $0xd0] sm:$0xff]
        %v459 = vld [vmem:[%s226 + $0xd8] sm:$0xff]
        %v460 = vld [vmem:[%s226 + $0xe0] sm:$0xff]
        %v461 = vld [vmem:[%s226 + $0xe8] sm:$0xff]
        %v462 = vld [vmem:[%s226 + $0xf0] sm:$0xff]
        %v463 = vld [vmem:[%s226 + $0xf8] sm:$0xff]
        %464 = vmatpush.msra.mxu0 %v462
        %465 = vmatpush.msra.mxu0 %v460
        %466 = vmatpush.msra.mxu0 %v458
        %467 = vmatpush.msra.mxu0 %v456
        %468 = vmatpush.msra.mxu0 %v454
        %469 = vmatpush.msra.mxu0 %v452
        %470 = vmatpush.msra.mxu0 %v450
        %471 = vmatpush.msra.mxu0 %v448
        %472 = vmatpush.msra.mxu0 %v446
        %473 = vmatpush.msra.mxu0 %v444
        %474 = vmatpush.msra.mxu0 %v442
        %475 = vmatpush.msra.mxu0 %v440
        %476 = vmatpush.msra.mxu0 %v438
        %477 = vmatpush.msra.mxu0 %v436
        %478 = vmatpush.msra.mxu0 %v434
        %479 = vmatpush.msra.mxu0 %v432
        %480 = vmatmul.f32.gmra.mxu0 %v431
        %v481 = vpop.f32.mrf.mxu0
        %v482 = vadd.f32 0.0, %v481
        %483 = vdwg.mxu0
        %484 = vmatpush.msra.mxu0 %v463
        %485 = vmatpush.msra.mxu0 %v461
        %486 = vmatpush.msra.mxu0 %v459
        %487 = vmatpush.msra.mxu0 %v457
        %488 = vmatpush.msra.mxu0 %v455
        %489 = vmatpush.msra.mxu0 %v453
        %490 = vmatpush.msra.mxu0 %v451
        %491 = vmatpush.msra.mxu0 %v449
        %492 = vmatpush.msra.mxu0 %v447
        %493 = vmatpush.msra.mxu0 %v445
        %494 = vmatpush.msra.mxu0 %v443
        %495 = vmatpush.msra.mxu0 %v441
        %496 = vmatpush.msra.mxu0 %v439
        %497 = vmatpush.msra.mxu0 %v437
        %498 = vmatpush.msra.mxu0 %v435
        %499 = vmatpush.msra.mxu0 %v433
        %500 = vmatmul.f32.gmra.mxu0 %v431
        %v501 = vpop.f32.mrf.mxu0
        %v502 = vadd.f32 0.0, %v501
        %503 = vdwg.mxu0
        %p504 = scmp.eq.s32.totalorder %s28, 0
        // Predicated region
        $region41: #{_llama_mlp_pallas.1} parent=31 // pred_check
          %p505 = pneg %p504
        $region42: #{_llama_mlp_pallas.1} parent=31 // pred_check_branch
          %507 = sbr.rel (%p505) target = $region44
        $region43: #{_llama_mlp_pallas.1} parent=31 // pred_region
          %508 = vst [vmem:[#allocation2] sm:$0xff] %v482
          %509 = vst [vmem:[#allocation2 + $0x8] sm:$0xff] %v502
        $region44: #{_llama_mlp_pallas.1} parent=31 // pred_fallthru
          _
        %p510 = scmp.ne.s32.totalorder %s28, 0
        // Predicated region
        $region45: #{_llama_mlp_pallas.1} parent=31 // pred_check
          %p511 = pneg %p510
        $region46: #{_llama_mlp_pallas.1} parent=31 // pred_check_branch
          %513 = sbr.rel (%p511) target = $region48
        $region47: #{_llama_mlp_pallas.1} parent=31 // pred_region
          %v514 = vld [vmem:[#allocation2] sm:$0xff]
          %v515 = vld [vmem:[#allocation2 + $0x8] sm:$0xff]
          %v516 = vadd.f32 %v514, %v482
          %v517 = vadd.f32 %v515, %v502
          %518 = vst [vmem:[#allocation2] sm:$0xff] %v516
          %519 = vst [vmem:[#allocation2 + $0x8] sm:$0xff] %v517
        $region48: #{_llama_mlp_pallas.1} parent=31 // pred_fallthru
          _
        %p520 = scmp.eq.s32.totalorder %s28, 3
        // Predicated region
        $region49: #{_llama_mlp_pallas.1} parent=31 // pred_check
          %p521 = pneg %p520
        $region50: #{_llama_mlp_pallas.1} parent=31 // pred_check_branch
          %523 = sbr.rel (%p521) target = $region52
        $region51: #{_llama_mlp_pallas.1} parent=31 // pred_region
          %v524 = vld [vmem:[#allocation2] sm:$0xff]
          %v525 = vld [vmem:[#allocation2 + $0x8] sm:$0xff]
          %526 = vst [vmem:[%s259] sm:$0xff] %v524
          %527 = vst [vmem:[%s259 + $0x8] sm:$0xff] %v525
        $region52: #{_llama_mlp_pallas.1} parent=31 // pred_fallthru
          _
        %s528 = sand.u32 %s121, 1
        %s529 = scalar_lea.sflag [#allocation5], %s528
        %s530 = sand.u32 %s121, 1
        %s531 = smul.addr %s530, 16
        %s532 = scalar_lea.vmem [#allocation8], %s531
        // Predicated region
        $region53: #{_llama_mlp_pallas.1} parent=31 // pred_check
          %p533 = pneg %p131
        $region54: #{_llama_mlp_pallas.1} parent=31 // pred_check_branch
          %535 = sbr.rel (%p533) target = $region56
        $region55: #{_llama_mlp_pallas.1} parent=31 // pred_region
          %537 = vsyncadd %s529, 0
          %s538 = smul.addr %s27, 2
          %s539 = smul.addr %s538, 8
          %s540 = scalar_lea.hbm %s3, %s539
          %s542 = sshll.u32 %s532, 4
          %s543 = int_to_ptr.vmem [resolvable:$true] %s542
          %s544 = sshll.u32 %s540, 4
          %s545 = int_to_ptr.hbm [resolvable:$true] %s544
          %547 = dma.vmem_to_hbm [thread:$0]  %s543, 256, %s545, %s529
        $region56: #{_llama_mlp_pallas.1} parent=31 // pred_fallthru
          _
      $region32: #{_llama_mlp_pallas.1} parent=5 // pred_fallthru
        _
      %p548 = scmp.le.s32.totalorder 2, %s18
      // Predicated region
      $region57: #{_llama_mlp_pallas.1} parent=5 // pred_check
        %p549 = pneg %p548
      $region58: #{_llama_mlp_pallas.1} parent=5 // pred_check_branch
        %551 = sbr.rel (%p549) target = $region60
      $region59: #{_llama_mlp_pallas.1} parent=5 // pred_region
        %s552 = ssub.s32 %s18, 2
        // Predicated region
        $region61: #{_llama_mlp_pallas.1} parent=59 // pred_check
          %p553 = pneg %p137
        $region62: #{_llama_mlp_pallas.1} parent=59 // pred_check_branch
          %555 = sbr.rel (%p553) target = $region64
        $region63: #{_llama_mlp_pallas.1} parent=59 // pred_region
          %s556 = sand.u32 %s122, 1
          %s557 = scalar_lea.sflag [#allocation5], %s556
          %s558 = sand.u32 %s122, 1
          %s559 = smul.addr %s558, 16
          %s560 = scalar_lea.vmem [#allocation8], %s559
          %562 = dma.done %s557, 256
        $region64: #{_llama_mlp_pallas.1} parent=59 // pred_fallthru
          _
      $region60: #{_llama_mlp_pallas.1} parent=5 // pred_fallthru
        _
    $region6: #{_llama_mlp_pallas.1} parent=1 // loop_footer
      %s22 = sadd.s32 1, %s18
    $region7: #{_llama_mlp_pallas.1} parent=1 // loop_footer_branch
      %17 = sbr.rel target = $region3
    $region8: #{_llama_mlp_pallas.1} parent=1 // loop_exit
      _
    %563 = vsyncpa [#allocation4], 1
    %s564 = scalar_lea.sflag [#allocation4], 1
    %565 = vsyncpa %s564, 1
    %566 = vsyncpa [#allocation7], 1
    %s567 = scalar_lea.sflag [#allocation7], 1
    %568 = vsyncpa %s567, 1
    %569 = vsyncpa [#allocation5], 1
    %s570 = scalar_lea.sflag [#allocation5], 1
    %571 = vsyncpa %s570, 1

</llo_original>
